<compile_context>
chip_gen: v7x
topology: tpu7x:2x2x1
jax: 0.10.0
libtpu: 0.0.40
codegen_flags: <defaults>
</compile_context>

<pallas_src>
import functools

import numpy as np
import jax
import jax.numpy as jnp
from jax import lax
from jax.experimental import pallas as pl
from jax.experimental.pallas import tpu as pltpu


def get_positional_encoding(max_len: int, embed_size: int) -> jnp.ndarray:
    """Deterministic sinusoidal table, identical to the PyTorch module's helper."""
    position = np.arange(max_len)[:, np.newaxis]
    div_term = np.exp(np.arange(0, embed_size, 2) * -(np.log(10000.0) / embed_size))
    pe = np.zeros((max_len, embed_size), dtype=np.float64)
    pe[:, 0::2] = np.sin(position * div_term)
    pe[:, 1::2] = np.cos(position * div_term)
    return jnp.asarray(pe, dtype=jnp.float32)


def _pe2d_kernel(x_ref, gidx_ref, grp_ref, iota_ref, tbl_ref, seg_ref, g_ref, b_ref,
                 o_ref, *, embed_size: int, eps: float):
    f32 = jnp.float32
    x = x_ref[...].astype(f32)                      # (tm, lanes) lane-dense packed rows
    gidx = gidx_ref[...].astype(f32)                # (tm, 2*pack) small ints, exact in f32

    # Broadcast each (segment, table) group's gather column across its K-range with one
    # tiny MXU matmul, then one compare against the constant column iota -> combined
    # one-hot for ALL line+token segments at once.
    gb = jnp.dot(gidx, grp_ref[...], preferred_element_type=f32)     # (tm, K)
    oh = (jnp.abs(gb - iota_ref[...]) < 0.5).astype(f32)             # (tm, K)

    # Single fused gather matmul; one add into x (no per-segment accumulate passes).
    pe = x + jnp.dot(oh, tbl_ref[...], preferred_element_type=f32)   # (tm, lanes)

    # Segmented LayerNorm over each embed_size-wide lane group via block-diagonal ones
    # matmuls.  Both reductions depend only on pe -> no MXU dependency chain.
    inv_e = f32(1.0 / embed_size)
    seg = seg_ref[...]
    mean = jnp.dot(pe, seg, preferred_element_type=f32) * inv_e
    ex2 = jnp.dot(pe * pe, seg, preferred_element_type=f32) * inv_e
    var = ex2 - mean * mean                                          # biased, like torch
    normed = (pe - mean) * lax.rsqrt(var + f32(eps))
    o_ref[...] = (normed * g_ref[...] + b_ref[...]).astype(o_ref.dtype)


def positional_encoding_2d(token_embeddings, line_numbers, token_positions,
                           line_pe, token_pe, gamma, beta, *,
                           eps: float = 1e-5, block_rows: int = 1024):
    B, S, E = token_embeddings.shape
    N = B * S
    max_lines = line_pe.shape[0]
    max_toks = token_pe.shape[0]

    # Pack 128//E original rows into one lane-dense 128-wide packed row (if E divides 128).
    # NOTE: when E does not divide 128 the (tm, E) blocks are lane-sparse (masked stores):
    # correct but slower.
    pack = 128 // E if (E < 128 and 128 % E == 0) else 1
    lanes = pack * E

    # --- tiny index preprocessing (clamp like torch; negligible HBM traffic) ---
    li = jnp.clip(line_numbers.reshape(-1).astype(jnp.int32), 0, max_lines - 1)
    ti = jnp.clip(token_positions.reshape(-1).astype(jnp.int32), 0, max_toks - 1)

    x = token_embeddings                     # native dtype; cast happens inside the kernel
    if N % pack != 0:
        # TODO(synk): rare ragged case (B*S not a multiple of 128//E) costs one pad copy.
        padn = pack - N % pack
        x = jnp.pad(x.reshape(N, E), ((0, padn), (0, 0)))
        li = jnp.pad(li, (0, padn))
        ti = jnp.pad(ti, (0, padn))
        n_flat = N + padn
    else:
        n_flat = N
    rows = n_flat // pack

    # lane-pack via a free contiguous reshape: packed row p = original rows p*pack .. +pack-1
    x_p = x.reshape(rows, lanes)

    # gather-column layout:  [pack line segments of L_pad rows | pack token segments of T_pad]
    L_pad = -(-max_lines // 8) * 8
    T_pad = -(-max_toks // 8) * 8
    K_l = pack * L_pad
    K = K_l + pack * T_pad
    K_pad = -(-K // 128) * 128               # lane-dense one-hot intermediate

    li_p = li.reshape(rows, pack)
    ti_p = ti.reshape(rows, pack)
    seg_off = jnp.arange(pack, dtype=jnp.int32)
    gidx = jnp.concatenate([li_p + seg_off * L_pad,
                            ti_p + K_l + seg_off * T_pad], axis=1)   # (rows, 2*pack) int32

    # --- constants (fully VMEM-resident; constant index_map -> fetched once) ---
    col = np.arange(K_pad)
    grp_of_col = np.where(col < K_l, col // L_pad, pack + (col - K_l) // T_pad)
    grp_of_col = np.where(col < K, grp_of_col, -1)                   # padding cols: no group
    G = (grp_of_col[None, :] == np.arange(2 * pack)[:, None]).astype(np.float32)

    tbl = jnp.zeros((K_pad, lanes), jnp.float32)
    lpe = line_pe.astype(jnp.float32)
    tpe = token_pe.astype(jnp.float32)
    for s in range(pack):
        tbl = tbl.at[s * L_pad: s * L_pad + max_lines, s * E:(s + 1) * E].set(lpe)
        base = K_l + s * T_pad
        tbl = tbl.at[base: base + max_toks, s * E:(s + 1) * E].set(tpe)

    iota_k = np.arange(K_pad, dtype=np.float32)[None, :]             # (1, K_pad)
    seg_ones = (np.arange(lanes)[:, None] // E ==
                np.arange(lanes)[None, :] // E).astype(np.float32)   # block-diagonal ones
    g_t = jnp.tile(gamma.astype(jnp.float32), pack).reshape(1, lanes)
    b_t = jnp.tile(beta.astype(jnp.float32), pack).reshape(1, lanes)

    # tiling: one independent grid axis over packed rows; ragged last block is handled by
    # Pallas partial-block semantics (rows are independent, OOB writes dropped).
    if rows <= block_rows:
        tm, grid = rows, 1
    else:
        tm = block_rows                      # multiple of 8
        grid = pl.cdiv(rows, tm)

    kernel = functools.partial(_pe2d_kernel, embed_size=E, eps=eps)

    # NOTE: constant operands could use pipeline_mode=pl.Buffered(1) to skip double
    # buffering; omitted here (minor hygiene) to keep lowering maximally portable.
    out = pl.pallas_call(
        kernel,
        out_shape=jax.ShapeDtypeStruct((rows, lanes), token_embeddings.dtype),
        grid=(grid,),
        in_specs=[
            pl.BlockSpec((tm, lanes), lambda i: (i, 0)),       # packed x rows
            pl.BlockSpec((tm, 2 * pack), lambda i: (i, 0)),    # combined gather indices
            pl.BlockSpec(G.shape, lambda i: (0, 0)),           # group indicator (const)
            pl.BlockSpec(iota_k.shape, lambda i: (0, 0)),      # column iota (const)
            pl.BlockSpec(tbl.shape, lambda i: (0, 0)),         # fused PE table (const)
            pl.BlockSpec(seg_ones.shape, lambda i: (0, 0)),    # block-diag ones (const)
            pl.BlockSpec((1, lanes), lambda i: (0, 0)),        # gamma (const)
            pl.BlockSpec((1, lanes), lambda i: (0, 0)),        # beta  (const)
        ],
        out_specs=pl.BlockSpec((tm, lanes), lambda i: (i, 0)),
        compiler_params=pltpu.CompilerParams(
            dimension_semantics=("parallel",)),
    )(x_p, gidx, jnp.asarray(G), jnp.asarray(iota_k), tbl,
      jnp.asarray(seg_ones), g_t, b_t)

    return out.reshape(rows * pack, E)[:N].reshape(B, S, E)


def reference(token_embeddings, line_numbers, token_positions,
              line_pe, token_pe, gamma, beta, eps=1e-5):
    ln = jnp.clip(line_numbers, 0, line_pe.shape[0] - 1)
    tp = jnp.clip(token_positions, 0, token_pe.shape[0] - 1)
    pe = token_embeddings + line_pe[ln] + token_pe[tp]
    mean = jnp.mean(pe, axis=-1, keepdims=True)
    var = jnp.mean((pe - mean) ** 2, axis=-1, keepdims=True)
    return (pe - mean) * lax.rsqrt(var + eps) * gamma + beta


if __name__ == "__main__":
    embed_size = 32
    max_lines = 20
    max_line_length = 24
    B, S = 2, 8

    # deterministic parameters (nn.LayerNorm default: weight=1, bias=0)
    line_pe = get_positional_encoding(max_lines, embed_size)
    token_pe = get_positional_encoding(max_line_length, embed_size)
    gamma = jnp.ones((embed_size,), jnp.float32)
    beta = jnp.zeros((embed_size,), jnp.float32)

    key = jax.random.PRNGKey(0)
    kx, kl, kt = jax.random.split(key, 3)
    token_embeddings = jax.random.normal(kx, (B, S, embed_size), dtype=jnp.float32)
    # include out-of-range indices so the clamp path is exercised
    line_numbers = jax.random.randint(kl, (B, S), 0, max_lines + 8, dtype=jnp.int32)
    token_positions = jax.random.randint(kt, (B, S), 0, max_line_length + 8, dtype=jnp.int32)

    run = jax.jit(positional_encoding_2d)
    out = run(token_embeddings, line_numbers, token_positions,
              line_pe, token_pe, gamma, beta)
    out = jax.block_until_ready(out)

    ref = reference(token_embeddings, line_numbers, token_positions,
                    line_pe, token_pe, gamma, beta)
    np.testing.assert_allclose(np.asarray(out), np.asarray(ref), atol=1e-4, rtol=1e-4)

    # TODO(synk): at this tiny demo size (N=16) plain XLA fusion beats any pallas_call
    # launch; the kernel is sized for N in the thousands+ (block_rows=1024, 2048 on v7x).
    print("KERNEL_OK")
</pallas_src>

<mosaic_0001>
module attributes {stable_mosaic.version = 11 : i64} {
  func.func @_pe2d_kernel(%arg0: i32, %arg1: memref<4x128xf32, #tpu.memory_space<vmem>>, %arg2: memref<4x8xi32, #tpu.memory_space<vmem>>, %arg3: memref<8x256xf32, #tpu.memory_space<vmem>>, %arg4: memref<1x256xf32, #tpu.memory_space<vmem>>, %arg5: memref<256x128xf32, #tpu.memory_space<vmem>>, %arg6: memref<128x128xf32, #tpu.memory_space<vmem>>, %arg7: memref<1x128xf32, #tpu.memory_space<vmem>>, %arg8: memref<1x128xf32, #tpu.memory_space<vmem>>, %arg9: memref<4x128xf32, #tpu.memory_space<vmem>>) attributes {dimension_semantics = [#tpu.dimension_semantics<parallel>], iteration_bounds = array<i64: 1>, scalar_prefetch = 0 : i64, scratch_operands = 0 : i64, tpu.core_type = #tpu.core_type<tc>, window_params = [{transform_indices = @transform_0, window_bounds = array<i64: 4, 128>}, {transform_indices = @transform_1, window_bounds = array<i64: 4, 8>}, {pipeline_mode = #tpu.pipeline_mode<synchronous>, transform_indices = @transform_2, window_bounds = array<i64: 8, 256>}, {pipeline_mode = #tpu.pipeline_mode<synchronous>, transform_indices = @transform_3, window_bounds = array<i64: 1, 256>}, {pipeline_mode = #tpu.pipeline_mode<synchronous>, transform_indices = @transform_4, window_bounds = array<i64: 256, 128>}, {pipeline_mode = #tpu.pipeline_mode<synchronous>, transform_indices = @transform_5, window_bounds = array<i64: 128, 128>}, {pipeline_mode = #tpu.pipeline_mode<synchronous>, transform_indices = @transform_6, window_bounds = array<i64: 1, 128>}, {pipeline_mode = #tpu.pipeline_mode<synchronous>, transform_indices = @transform_7, window_bounds = array<i64: 1, 128>}, {transform_indices = @transform_8, window_bounds = array<i64: 4, 128>}]} {
    %c0 = arith.constant 0 : index
    %c0_0 = arith.constant 0 : index
    %0 = vector.load %arg1[%c0, %c0_0] : memref<4x128xf32, #tpu.memory_space<vmem>>, vector<4x128xf32>
    %c0_1 = arith.constant 0 : index
    %c0_2 = arith.constant 0 : index
    %1 = vector.load %arg2[%c0_1, %c0_2] : memref<4x8xi32, #tpu.memory_space<vmem>>, vector<4x8xi32>
    %2 = arith.sitofp %1 : vector<4x8xi32> to vector<4x8xf32>
    %c0_3 = arith.constant 0 : index
    %c0_4 = arith.constant 0 : index
    %3 = vector.load %arg3[%c0_3, %c0_4] : memref<8x256xf32, #tpu.memory_space<vmem>>, vector<8x256xf32>
    %cst = arith.constant dense<0.000000e+00> : vector<4x256xf32>
    %4 = tpu.matmul %2, %3, %cst {dimension_numbers = #tpu.dot_dimension_numbers<[1], [0], [0], [1], [0, 0, 1, 1], [], []>} : vector<4x8xf32>, vector<8x256xf32>, vector<4x256xf32> -> vector<4x256xf32>
    %c0_5 = arith.constant 0 : index
    %c0_6 = arith.constant 0 : index
    %5 = vector.load %arg4[%c0_5, %c0_6] : memref<1x256xf32, #tpu.memory_space<vmem>>, vector<1x256xf32>
    %6 = vector.broadcast %5 : vector<1x256xf32> to vector<4x256xf32>
    %7 = arith.subf %4, %6 : vector<4x256xf32>
    %8 = math.absf %7 : vector<4x256xf32>
    %cst_7 = arith.constant 5.000000e-01 : f32
    %9 = vector.broadcast %cst_7 : f32 to vector<4x256xf32>
    %10 = arith.cmpf olt, %8, %9 : vector<4x256xf32>
    %11 = arith.extui %10 : vector<4x256xi1> to vector<4x256xi32>
    %12 = arith.sitofp %11 : vector<4x256xi32> to vector<4x256xf32>
    %c0_8 = arith.constant 0 : index
    %c0_9 = arith.constant 0 : index
    %13 = vector.load %arg5[%c0_8, %c0_9] : memref<256x128xf32, #tpu.memory_space<vmem>>, vector<256x128xf32>
    %cst_10 = arith.constant dense<0.000000e+00> : vector<4x128xf32>
    %14 = tpu.matmul %12, %13, %cst_10 {dimension_numbers = #tpu.dot_dimension_numbers<[1], [0], [0], [1], [0, 0, 1, 1], [], []>} : vector<4x256xf32>, vector<256x128xf32>, vector<4x128xf32> -> vector<4x128xf32>
    %15 = arith.addf %0, %14 : vector<4x128xf32>
    %c0_11 = arith.constant 0 : index
    %c0_12 = arith.constant 0 : index
    %16 = vector.load %arg6[%c0_11, %c0_12] : memref<128x128xf32, #tpu.memory_space<vmem>>, vector<128x128xf32>
    %cst_13 = arith.constant dense<0.000000e+00> : vector<4x128xf32>
    %17 = tpu.matmul %15, %16, %cst_13 {dimension_numbers = #tpu.dot_dimension_numbers<[1], [0], [0], [1], [0, 0, 1, 1], [], []>} : vector<4x128xf32>, vector<128x128xf32>, vector<4x128xf32> -> vector<4x128xf32>
    %cst_14 = arith.constant 3.125000e-02 : f32
    %18 = vector.broadcast %cst_14 : f32 to vector<4x128xf32>
    %19 = arith.mulf %17, %18 : vector<4x128xf32>
    %20 = arith.mulf %15, %15 : vector<4x128xf32>
    %cst_15 = arith.constant dense<0.000000e+00> : vector<4x128xf32>
    %21 = tpu.matmul %20, %16, %cst_15 {dimension_numbers = #tpu.dot_dimension_numbers<[1], [0], [0], [1], [0, 0, 1, 1], [], []>} : vector<4x128xf32>, vector<128x128xf32>, vector<4x128xf32> -> vector<4x128xf32>
    %cst_16 = arith.constant 3.125000e-02 : f32
    %22 = vector.broadcast %cst_16 : f32 to vector<4x128xf32>
    %23 = arith.mulf %21, %22 : vector<4x128xf32>
    %24 = arith.mulf %19, %19 : vector<4x128xf32>
    %25 = arith.subf %23, %24 : vector<4x128xf32>
    %26 = arith.subf %15, %19 : vector<4x128xf32>
    %cst_17 = arith.constant 9.99999974E-6 : f32
    %27 = vector.broadcast %cst_17 : f32 to vector<4x128xf32>
    %28 = arith.addf %25, %27 : vector<4x128xf32>
    %29 = math.rsqrt %28 : vector<4x128xf32>
    %30 = arith.mulf %26, %29 : vector<4x128xf32>
    %c0_18 = arith.constant 0 : index
    %c0_19 = arith.constant 0 : index
    %31 = vector.load %arg7[%c0_18, %c0_19] : memref<1x128xf32, #tpu.memory_space<vmem>>, vector<1x128xf32>
    %32 = vector.broadcast %31 : vector<1x128xf32> to vector<4x128xf32>
    %33 = arith.mulf %30, %32 : vector<4x128xf32>
    %c0_20 = arith.constant 0 : index
    %c0_21 = arith.constant 0 : index
    %34 = vector.load %arg8[%c0_20, %c0_21] : memref<1x128xf32, #tpu.memory_space<vmem>>, vector<1x128xf32>
    %35 = vector.broadcast %34 : vector<1x128xf32> to vector<4x128xf32>
    %36 = arith.addf %33, %35 : vector<4x128xf32>
    %c0_22 = arith.constant 0 : index
    %c0_23 = arith.constant 0 : index
    %37 = vector.load %arg9[%c0_22, %c0_23] : memref<4x128xf32, #tpu.memory_space<vmem>>, vector<4x128xf32>
    tpu.vector_store %arg9[%c0_22, %c0_23], %36 {strides = array<i32>} : memref<4x128xf32, #tpu.memory_space<vmem>>, vector<4x128xf32>,
    return
  }
  func.func @transform_0(%arg0: i32) -> (i32, i32) {
    %c0_i32 = arith.constant 0 : i32
    %c0_i32_0 = arith.constant 0 : i32
    return %arg0, %c0_i32 : i32, i32
  }
  func.func @transform_1(%arg0: i32) -> (i32, i32) {
    %c0_i32 = arith.constant 0 : i32
    %c0_i32_0 = arith.constant 0 : i32
    return %arg0, %c0_i32 : i32, i32
  }
  func.func @transform_2(%arg0: i32) -> (i32, i32) {
    %c0_i32 = arith.constant 0 : i32
    %c0_i32_0 = arith.constant 0 : i32
    %c0_i32_1 = arith.constant 0 : i32
    return %c0_i32, %c0_i32_0 : i32, i32
  }
  func.func @transform_3(%arg0: i32) -> (i32, i32) {
    %c0_i32 = arith.constant 0 : i32
    %c0_i32_0 = arith.constant 0 : i32
    %c0_i32_1 = arith.constant 0 : i32
    return %c0_i32, %c0_i32_0 : i32, i32
  }
  func.func @transform_4(%arg0: i32) -> (i32, i32) {
    %c0_i32 = arith.constant 0 : i32
    %c0_i32_0 = arith.constant 0 : i32
    %c0_i32_1 = arith.constant 0 : i32
    return %c0_i32, %c0_i32_0 : i32, i32
  }
  func.func @transform_5(%arg0: i32) -> (i32, i32) {
    %c0_i32 = arith.constant 0 : i32
    %c0_i32_0 = arith.constant 0 : i32
    %c0_i32_1 = arith.constant 0 : i32
    return %c0_i32, %c0_i32_0 : i32, i32
  }
  func.func @transform_6(%arg0: i32) -> (i32, i32) {
    %c0_i32 = arith.constant 0 : i32
    %c0_i32_0 = arith.constant 0 : i32
    %c0_i32_1 = arith.constant 0 : i32
    return %c0_i32, %c0_i32_0 : i32, i32
  }
  func.func @transform_7(%arg0: i32) -> (i32, i32) {
    %c0_i32 = arith.constant 0 : i32
    %c0_i32_0 = arith.constant 0 : i32
    %c0_i32_1 = arith.constant 0 : i32
    return %c0_i32, %c0_i32_0 : i32, i32
  }
  func.func @transform_8(%arg0: i32) -> (i32, i32) {
    %c0_i32 = arith.constant 0 : i32
    %c0_i32_0 = arith.constant 0 : i32
    return %arg0, %c0_i32 : i32, i32
  }
}

</mosaic_0001>

<llo_original>
// kernel: tile.13
$region0: #{tile.13}
  #allocation0 [shape = 's32[1]{0}', space=sflag, size = 0x4, scoped, tag = 'scoped memory for tile.13']
  %s0 = inlined_call_operand.vmem [shape: f32[32], index: 0, kind: input, shape index: {}]
  %s1 = inlined_call_operand.vmem [shape: f32[4,32], index: 1, kind: output, shape index: {}]
  // Predicated region
  $region2: #{tile.13} parent=0 // pred_check
    _
  $region3: #{tile.13} parent=0 // pred_check_branch
    %3 = sbr.rel (0) target = $region5
  $region4: #{tile.13} parent=0 // pred_region
    _
  $region5: #{tile.13} parent=0 // pred_fallthru
    _
  %v4 = vld [vmem:[%s0] ss:$0 sm:$0xff]
  %5 = vst [vmem:[%s1] sm:$0xf] %v4

// kernel: tile.14
$region0: #{tile.14}
  %s0 = inlined_call_operand.vmem [shape: f32[4,32], index: 0, kind: input, shape index: {}]
  %s1 = inlined_call_operand.vmem [shape: f32[1,128], index: 1, kind: output, shape index: {}]
  $region1: #{tile.14} parent=0
    #allocation0 [shape = 'u8[4096]{0}', space=vmem, size = 0x1000, scoped, tag = 'scoped mem for output reshape']
    #allocation1 [shape = 'u8[4096]{0}', space=vmem, size = 0x1000, scoped, tag = 'scoped mem for input reshape']
    %s3 = sshllo.u32 0, 4
    %v4 = vld [vmem:[%s0] sm:%s3]
    %5 = vst [vmem:[#allocation1] sm:%s3] %v4
    %v6 = vld [vmem:[#allocation1] sm:$0x1]
    %vm7 = vcmask 261120
    %8 = vst.msk [vmem:[#allocation0] sm:$0x1] %vm7, %v6
    %s9 = scalar_lea.vmem [#allocation1], 3
    %v10 = vld [vmem:[%s9] sm:$0x1]
    %11 = vrot.lane.b32.xlu0 %v10, 96
    %v12 = vpop.permute.xlu0 %11
    %vm13 = vcmask 1048320
    %14 = vst.msk [vmem:[#allocation0] sm:$0x1] %vm13, %v12
    %s15 = scalar_lea.vmem [#allocation1], 2
    %v16 = vld [vmem:[%s15] sm:$0x1]
    %17 = vrot.lane.b32.xlu0 %v16, 64
    %v18 = vpop.permute.xlu0 %17
    %vm19 = vcmask 785920
    %20 = vst.msk [vmem:[#allocation0] sm:$0x1] %vm19, %v18
    %s21 = scalar_lea.vmem [#allocation1], 1
    %v22 = vld [vmem:[%s21] sm:$0x1]
    %23 = vrot.lane.b32.xlu0 %v22, 32
    %v24 = vpop.permute.xlu0 %23
    %vm25 = vcmask 523520
    %26 = vst.msk [vmem:[#allocation0] sm:$0x1] %vm25, %v24
    %s28 = sshllo.u32 0, 1
    %v30 = vld [vmem:[#allocation0] sm:%s28]
    %s31 = sshllo.u32 0, 1
    %32 = vst [vmem:[%s1] sm:%s31] %v30

// kernel: positional_encoding_2d.1
$region0: #{positional_encoding_2d.1}
  #allocation0 [shape = 'u32[]', space=smem, size = 0x4, offset = 0x4, fixed_abs, tag = 'smem constant byte address 0x4 - core index']
  #allocation1 [shape = 'u32[144,128]{1,0:T(1,128)}', space=vmem, size = 0x12000, scoped, tag = 'internal scratch']
  %s0 = inlined_call_operand.vmem [shape: f32[4,128], index: 0, kind: input, shape index: {}]
  %s1 = inlined_call_operand.vmem [shape: s32[4,8], index: 1, kind: input, shape index: {}]
  %s2 = inlined_call_operand.vmem [shape: f32[8,256], index: 2, kind: input, shape index: {}]
  %s3 = inlined_call_operand.vmem [shape: f32[1,256], index: 3, kind: input, shape index: {}]
  %s4 = inlined_call_operand.vmem [shape: f32[256,128], index: 4, kind: input, shape index: {}]
  %s5 = inlined_call_operand.vmem [shape: f32[128,128], index: 5, kind: input, shape index: {}]
  %s6 = inlined_call_operand.vmem [shape: f32[1,128], index: 6, kind: input, shape index: {}]
  %s7 = inlined_call_operand.vmem [shape: f32[1,128], index: 7, kind: input, shape index: {}]
  %s8 = inlined_call_operand.vmem [shape: f32[4,128], index: 8, kind: output, shape index: {}]
  %s9 = sld [smem:[#allocation0]]
  $region42: #{positional_encoding_2d.1} parent=0
    _
  %s11 = ssub.s32 1, %s9
  %s12 = scalar_select 0, %s11, %s9
  // Predicated region
  $region2: #{positional_encoding_2d.1} parent=0 // pred_check
    _
  $region3: #{positional_encoding_2d.1} parent=0 // pred_check_branch
    %14 = sbr.rel (0) target = $region5
  $region4: #{positional_encoding_2d.1} parent=0 // pred_region
    _
  $region5: #{positional_encoding_2d.1} parent=0 // pred_fallthru
    _
  // Predicated region
  $region6: #{positional_encoding_2d.1} parent=0 // pred_check
    _
  $region7: #{positional_encoding_2d.1} parent=0 // pred_check_branch
    %16 = sbr.rel (0) target = $region9
  $region8: #{positional_encoding_2d.1} parent=0 // pred_region
    _
  $region9: #{positional_encoding_2d.1} parent=0 // pred_fallthru
    _
  // Predicated region
  $region10: #{positional_encoding_2d.1} parent=0 // pred_check
    _
  $region11: #{positional_encoding_2d.1} parent=0 // pred_check_branch
    %18 = sbr.rel (0) target = $region13
  $region12: #{positional_encoding_2d.1} parent=0 // pred_region
    _
  $region13: #{positional_encoding_2d.1} parent=0 // pred_fallthru
    _
  // Predicated region
  $region14: #{positional_encoding_2d.1} parent=0 // pred_check
    _
  $region15: #{positional_encoding_2d.1} parent=0 // pred_check_branch
    %20 = sbr.rel (0) target = $region17
  $region16: #{positional_encoding_2d.1} parent=0 // pred_region
    _
  $region17: #{positional_encoding_2d.1} parent=0 // pred_fallthru
    _
  // Predicated region
  $region18: #{positional_encoding_2d.1} parent=0 // pred_check
    _
  $region19: #{positional_encoding_2d.1} parent=0 // pred_check_branch
    %22 = sbr.rel (0) target = $region21
  $region20: #{positional_encoding_2d.1} parent=0 // pred_region
    _
  $region21: #{positional_encoding_2d.1} parent=0 // pred_fallthru
    _
  // Predicated region
  $region22: #{positional_encoding_2d.1} parent=0 // pred_check
    _
  $region23: #{positional_encoding_2d.1} parent=0 // pred_check_branch
    %24 = sbr.rel (0) target = $region25
  $region24: #{positional_encoding_2d.1} parent=0 // pred_region
    _
  $region25: #{positional_encoding_2d.1} parent=0 // pred_fallthru
    _
  // Predicated region
  $region26: #{positional_encoding_2d.1} parent=0 // pred_check
    _
  $region27: #{positional_encoding_2d.1} parent=0 // pred_check_branch
    %26 = sbr.rel (0) target = $region29
  $region28: #{positional_encoding_2d.1} parent=0 // pred_region
    _
  $region29: #{positional_encoding_2d.1} parent=0 // pred_fallthru
    _
  // Predicated region
  $region30: #{positional_encoding_2d.1} parent=0 // pred_check
    _
  $region31: #{positional_encoding_2d.1} parent=0 // pred_check_branch
    %28 = sbr.rel (0) target = $region33
  $region32: #{positional_encoding_2d.1} parent=0 // pred_region
    _
  $region33: #{positional_encoding_2d.1} parent=0 // pred_fallthru
    _
  %v29 = vld [vmem:[%s0] sm:$0xf]
  %v30 = vld [vmem:[%s1] sm:$0xf]
  %v31 = vcvt.s32.f32 %v30
  %v32 = vld [vmem:[%s2] sm:$0xff]
  %v33 = vld [vmem:[%s2 + $0x8] sm:$0xff]
  %vm34 = vcmask 64512
  %v36 = vsel %vm34, %v31, 0
  %38 = vmatprep.subr.mxu0 %v33
  %39 = vmatpush1.msra.mxu0 %v32
  %40 = vmatprep.subr.mxu0 0.0
  %41 = vmatpush1.msra.mxu0 0.0
  %42 = vmatprep.subr.mxu0 0.0
  %43 = vmatpush1.msra.mxu0 0.0
  %44 = vmatprep.subr.mxu0 0.0
  %45 = vmatpush1.msra.mxu0 0.0
  %46 = vmatprep.subr.mxu0 0.0
  %47 = vmatpush1.msra.mxu0 0.0
  %48 = vmatprep.subr.mxu0 0.0
  %49 = vmatpush1.msra.mxu0 0.0
  %50 = vmatprep.subr.mxu0 0.0
  %51 = vmatpush1.msra.mxu0 0.0
  %52 = vmatprep.subr.mxu0 0.0
  %53 = vmatpush1.msra.mxu0 0.0
  %54 = vmatprep.subr.mxu0 0.0
  %55 = vmatpush1.msra.mxu0 0.0
  %56 = vmatprep.subr.mxu0 0.0
  %57 = vmatpush1.msra.mxu0 0.0
  %58 = vmatprep.subr.mxu0 0.0
  %59 = vmatpush1.msra.mxu0 0.0
  %60 = vmatprep.subr.mxu0 0.0
  %61 = vmatpush1.msra.mxu0 0.0
  %62 = vmatprep.subr.mxu0 0.0
  %63 = vmatpush1.msra.mxu0 0.0
  %64 = vmatprep.subr.mxu0 0.0
  %65 = vmatpush1.msra.mxu0 0.0
  %66 = vmatprep.subr.mxu0 0.0
  %67 = vmatpush1.msra.mxu0 0.0
  %68 = vmatprep.subr.mxu0 0.0
  %69 = vmatpush1.msra.mxu0 0.0
  %70 = vmatprep.subr.mxu0 0.0
  %71 = vmatpush1.msra.mxu0 0.0
  %72 = vmatprep.subr.mxu0 0.0
  %73 = vmatpush1.msra.mxu0 0.0
  %74 = vmatprep.subr.mxu0 0.0
  %75 = vmatpush1.msra.mxu0 0.0
  %76 = vmatprep.subr.mxu0 0.0
  %77 = vmatpush1.msra.mxu0 0.0
  %78 = vmatprep.subr.mxu0 0.0
  %79 = vmatpush1.msra.mxu0 0.0
  %80 = vmatprep.subr.mxu0 0.0
  %81 = vmatpush1.msra.mxu0 0.0
  %82 = vmatprep.subr.mxu0 0.0
  %83 = vmatpush1.msra.mxu0 0.0
  %84 = vmatprep.subr.mxu0 0.0
  %85 = vmatpush1.msra.mxu0 0.0
  %86 = vmatprep.subr.mxu0 0.0
  %87 = vmatpush1.msra.mxu0 0.0
  %88 = vmatprep.subr.mxu0 0.0
  %89 = vmatpush1.msra.mxu0 0.0
  %90 = vmatprep.subr.mxu0 0.0
  %91 = vmatpush1.msra.mxu0 0.0
  %92 = vmatprep.subr.mxu0 0.0
  %93 = vmatpush1.msra.mxu0 0.0
  %94 = vmatprep.subr.mxu0 0.0
  %95 = vmatpush1.msra.mxu0 0.0
  %96 = vmatprep.subr.mxu0 0.0
  %97 = vmatpush1.msra.mxu0 0.0
  %98 = vmatprep.subr.mxu0 0.0
  %99 = vmatpush1.msra.mxu0 0.0
  %100 = vmatprep.subr.mxu0 0.0
  %101 = vmatpush1.msra.mxu0 0.0
  %102 = vmatprep.mubr.f32.mxu0 0.0
  %103 = vmatmul.mubr.f32.gmra.mrb[0].mxu0 %v36
  %v104 = vpop.f32.mrb[0].mxu0
  %v105 = vadd.f32 0.0, %v104
  %v106 = vpop.f32.mrb[0].mxu0
  %v107 = vadd.f32 0.0, %v106
  %108 = vdwg.mxu0
  %v109 = vld [vmem:[%s3] sm:$0x3]
  %v111 = vlaneseq
  %v112 = vshrl.u32 %v111, 7
  %v113 = vsub.s32 0, %v112
  %v114 = vrot.slane %v109, %v113
  %v115 = vlaneseq
  %v116 = vshrl.u32 %v115, 7
  %v117 = vsub.s32 1, %v116
  %v118 = vrot.slane %v109, %v117
  %v121 = vsub.f32 %v105, %v114
  %v122 = vsub.f32 %v107, %v118
  %v123 = vand.u32 2147483647, %v121
  %v124 = vand.u32 2147483647, %v122
  %vm125 = vcmp.lt.f32.partialorder %v123, 0.5
  %vm126 = vcmp.lt.f32.partialorder %v124, 0.5
  %v127 = vsel %vm125, 1, 0
  %v128 = vsel %vm126, 1, 0
  %v129 = vcvt.s32.f32 %v127
  %v130 = vcvt.s32.f32 %v128
  %v131 = vld [vmem:[%s4] sm:$0xff]
  %v132 = vld [vmem:[%s4 + $0x8] sm:$0xff]
  %v133 = vld [vmem:[%s4 + $0x10] sm:$0xff]
  %v134 = vld [vmem:[%s4 + $0x18] sm:$0xff]
  %v135 = vld [vmem:[%s4 + $0x20] sm:$0xff]
  %v136 = vld [vmem:[%s4 + $0x28] sm:$0xff]
  %v137 = vld [vmem:[%s4 + $0x30] sm:$0xff]
  %v138 = vld [vmem:[%s4 + $0x38] sm:$0xff]
  %v139 = vld [vmem:[%s4 + $0x40] sm:$0xff]
  %v140 = vld [vmem:[%s4 + $0x48] sm:$0xff]
  %v141 = vld [vmem:[%s4 + $0x50] sm:$0xff]
  %v142 = vld [vmem:[%s4 + $0x58] sm:$0xff]
  %v143 = vld [vmem:[%s4 + $0x60] sm:$0xff]
  %v144 = vld [vmem:[%s4 + $0x68] sm:$0xff]
  %v145 = vld [vmem:[%s4 + $0x70] sm:$0xff]
  %v146 = vld [vmem:[%s4 + $0x78] sm:$0xff]
  %v147 = vld [vmem:[%s4 + $0x80] sm:$0xff]
  %v148 = vld [vmem:[%s4 + $0x88] sm:$0xff]
  %v149 = vld [vmem:[%s4 + $0x90] sm:$0xff]
  %v150 = vld [vmem:[%s4 + $0x98] sm:$0xff]
  %v151 = vld [vmem:[%s4 + $0xa0] sm:$0xff]
  %v152 = vld [vmem:[%s4 + $0xa8] sm:$0xff]
  %v153 = vld [vmem:[%s4 + $0xb0] sm:$0xff]
  %v154 = vld [vmem:[%s4 + $0xb8] sm:$0xff]
  %v155 = vld [vmem:[%s4 + $0xc0] sm:$0xff]
  %v156 = vld [vmem:[%s4 + $0xc8] sm:$0xff]
  %v157 = vld [vmem:[%s4 + $0xd0] sm:$0xff]
  %v158 = vld [vmem:[%s4 + $0xd8] sm:$0xff]
  %v159 = vld [vmem:[%s4 + $0xe0] sm:$0xff]
  %v160 = vld [vmem:[%s4 + $0xe8] sm:$0xff]
  %v161 = vld [vmem:[%s4 + $0xf0] sm:$0xff]
  %v162 = vld [vmem:[%s4 + $0xf8] sm:$0xff]
  %163 = vmatprep.subr.mxu0 0.0
  %164 = vmatpush1.msra.mxu0 %v131
  %165 = vmatprep.subr.mxu0 0.0
  %166 = vmatpush1.msra.mxu0 %v132
  %167 = vmatprep.subr.mxu0 0.0
  %168 = vmatpush1.msra.mxu0 %v133
  %169 = vmatprep.subr.mxu0 0.0
  %170 = vmatpush1.msra.mxu0 %v134
  %171 = vmatprep.subr.mxu0 0.0
  %172 = vmatpush1.msra.mxu0 %v135
  %173 = vmatprep.subr.mxu0 0.0
  %174 = vmatpush1.msra.mxu0 %v136
  %175 = vmatprep.subr.mxu0 0.0
  %176 = vmatpush1.msra.mxu0 %v137
  %177 = vmatprep.subr.mxu0 0.0
  %178 = vmatpush1.msra.mxu0 %v138
  %179 = vmatprep.subr.mxu0 0.0
  %180 = vmatpush1.msra.mxu0 %v139
  %181 = vmatprep.subr.mxu0 0.0
  %182 = vmatpush1.msra.mxu0 %v140
  %183 = vmatprep.subr.mxu0 0.0
  %184 = vmatpush1.msra.mxu0 %v141
  %185 = vmatprep.subr.mxu0 0.0
  %186 = vmatpush1.msra.mxu0 %v142
  %187 = vmatprep.subr.mxu0 0.0
  %188 = vmatpush1.msra.mxu0 %v143
  %189 = vmatprep.subr.mxu0 0.0
  %190 = vmatpush1.msra.mxu0 %v144
  %191 = vmatprep.subr.mxu0 0.0
  %192 = vmatpush1.msra.mxu0 %v145
  %193 = vmatprep.subr.mxu0 0.0
  %194 = vmatpush1.msra.mxu0 %v146
  %195 = vmatprep.subr.mxu0 0.0
  %196 = vmatpush1.msra.mxu0 %v147
  %197 = vmatprep.subr.mxu0 0.0
  %198 = vmatpush1.msra.mxu0 %v148
  %199 = vmatprep.subr.mxu0 0.0
  %200 = vmatpush1.msra.mxu0 %v149
  %201 = vmatprep.subr.mxu0 0.0
  %202 = vmatpush1.msra.mxu0 %v150
  %203 = vmatprep.subr.mxu0 0.0
  %204 = vmatpush1.msra.mxu0 %v151
  %205 = vmatprep.subr.mxu0 0.0
  %206 = vmatpush1.msra.mxu0 %v152
  %207 = vmatprep.subr.mxu0 0.0
  %208 = vmatpush1.msra.mxu0 %v153
  %209 = vmatprep.subr.mxu0 0.0
  %210 = vmatpush1.msra.mxu0 %v154
  %211 = vmatprep.subr.mxu0 0.0
  %212 = vmatpush1.msra.mxu0 %v155
  %213 = vmatprep.subr.mxu0 0.0
  %214 = vmatpush1.msra.mxu0 %v156
  %215 = vmatprep.subr.mxu0 0.0
  %216 = vmatpush1.msra.mxu0 %v157
  %217 = vmatprep.subr.mxu0 0.0
  %218 = vmatpush1.msra.mxu0 %v158
  %219 = vmatprep.subr.mxu0 0.0
  %220 = vmatpush1.msra.mxu0 %v159
  %221 = vmatprep.subr.mxu0 0.0
  %222 = vmatpush1.msra.mxu0 %v160
  %223 = vmatprep.subr.mxu0 0.0
  %224 = vmatpush1.msra.mxu0 %v161
  %225 = vmatprep.subr.mxu0 0.0
  %226 = vmatpush1.msra.mxu0 %v162
  %227 = vmatprep.mubr.f32.mxu0 %v130
  %228 = vmatmul.mubr.f32.gmra.mrb[0].mxu0 %v129
  %v229 = vpop.f32.mrb[0].mxu0
  %v230 = vadd.f32 0.0, %v229
  %v231 = vpop.f32.mrb[0].mxu0
  %232 = vdwg.mxu0
  %v233 = vadd.f32 %v29, %v230
  %v234 = vld [vmem:[%s5] sm:$0xff]
  %v235 = vld [vmem:[%s5 + $0x8] sm:$0xff]
  %v236 = vld [vmem:[%s5 + $0x10] sm:$0xff]
  %v237 = vld [vmem:[%s5 + $0x18] sm:$0xff]
  %v238 = vld [vmem:[%s5 + $0x20] sm:$0xff]
  %v239 = vld [vmem:[%s5 + $0x28] sm:$0xff]
  %v240 = vld [vmem:[%s5 + $0x30] sm:$0xff]
  %v241 = vld [vmem:[%s5 + $0x38] sm:$0xff]
  %v242 = vld [vmem:[%s5 + $0x40] sm:$0xff]
  %v243 = vld [vmem:[%s5 + $0x48] sm:$0xff]
  %v244 = vld [vmem:[%s5 + $0x50] sm:$0xff]
  %v245 = vld [vmem:[%s5 + $0x58] sm:$0xff]
  %v246 = vld [vmem:[%s5 + $0x60] sm:$0xff]
  %v247 = vld [vmem:[%s5 + $0x68] sm:$0xff]
  %v248 = vld [vmem:[%s5 + $0x70] sm:$0xff]
  %v249 = vld [vmem:[%s5 + $0x78] sm:$0xff]
  %250 = vmatprep.subr.mxu0 0.0
  %251 = vmatpush1.msra.mxu0 %v234
  %252 = vmatprep.subr.mxu0 0.0
  %253 = vmatpush1.msra.mxu0 %v235
  %254 = vmatprep.subr.mxu0 0.0
  %255 = vmatpush1.msra.mxu0 %v236
  %256 = vmatprep.subr.mxu0 0.0
  %257 = vmatpush1.msra.mxu0 %v237
  %258 = vmatprep.subr.mxu0 0.0
  %259 = vmatpush1.msra.mxu0 %v238
  %260 = vmatprep.subr.mxu0 0.0
  %261 = vmatpush1.msra.mxu0 %v239
  %262 = vmatprep.subr.mxu0 0.0
  %263 = vmatpush1.msra.mxu0 %v240
  %264 = vmatprep.subr.mxu0 0.0
  %265 = vmatpush1.msra.mxu0 %v241
  %266 = vmatprep.subr.mxu0 0.0
  %267 = vmatpush1.msra.mxu0 %v242
  %268 = vmatprep.subr.mxu0 0.0
  %269 = vmatpush1.msra.mxu0 %v243
  %270 = vmatprep.subr.mxu0 0.0
  %271 = vmatpush1.msra.mxu0 %v244
  %272 = vmatprep.subr.mxu0 0.0
  %273 = vmatpush1.msra.mxu0 %v245
  %274 = vmatprep.subr.mxu0 0.0
  %275 = vmatpush1.msra.mxu0 %v246
  %276 = vmatprep.subr.mxu0 0.0
  %277 = vmatpush1.msra.mxu0 %v247
  %278 = vmatprep.subr.mxu0 0.0
  %279 = vmatpush1.msra.mxu0 %v248
  %280 = vmatprep.subr.mxu0 0.0
  %281 = vmatpush1.msra.mxu0 %v249
  %282 = vmatprep.subr.mxu0 0.0
  %283 = vmatpush1.msra.mxu0 0.0
  %284 = vmatprep.subr.mxu0 0.0
  %285 = vmatpush1.msra.mxu0 0.0
  %286 = vmatprep.subr.mxu0 0.0
  %287 = vmatpush1.msra.mxu0 0.0
  %288 = vmatprep.subr.mxu0 0.0
  %289 = vmatpush1.msra.mxu0 0.0
  %290 = vmatprep.subr.mxu0 0.0
  %291 = vmatpush1.msra.mxu0 0.0
  %292 = vmatprep.subr.mxu0 0.0
  %293 = vmatpush1.msra.mxu0 0.0
  %294 = vmatprep.subr.mxu0 0.0
  %295 = vmatpush1.msra.mxu0 0.0
  %296 = vmatprep.subr.mxu0 0.0
  %297 = vmatpush1.msra.mxu0 0.0
  %298 = vmatprep.subr.mxu0 0.0
  %299 = vmatpush1.msra.mxu0 0.0
  %300 = vmatprep.subr.mxu0 0.0
  %301 = vmatpush1.msra.mxu0 0.0
  %302 = vmatprep.subr.mxu0 0.0
  %303 = vmatpush1.msra.mxu0 0.0
  %304 = vmatprep.subr.mxu0 0.0
  %305 = vmatpush1.msra.mxu0 0.0
  %306 = vmatprep.subr.mxu0 0.0
  %307 = vmatpush1.msra.mxu0 0.0
  %308 = vmatprep.subr.mxu0 0.0
  %309 = vmatpush1.msra.mxu0 0.0
  %310 = vmatprep.subr.mxu0 0.0
  %311 = vmatpush1.msra.mxu0 0.0
  %312 = vmatprep.subr.mxu0 0.0
  %313 = vmatpush1.msra.mxu0 0.0
  %314 = vmatprep.mubr.f32.mxu0 0.0
  %315 = vmatmul.mubr.f32.gmra.mrb[0].mxu0 %v233
  %v316 = vpop.f32.mrb[0].mxu0
  %v317 = vadd.f32 0.0, %v316
  %v318 = vpop.f32.mrb[0].mxu0
  %319 = vdwg.mxu0
  %v320 = vmul.f32 %v317, 0.03125
  %v321 = vmul.f32 %v233, %v233
  %322 = vmatprep.subr.mxu0 0.0
  %323 = vmatpush1.msra.mxu0 %v234
  %324 = vmatprep.subr.mxu0 0.0
  %325 = vmatpush1.msra.mxu0 %v235
  %326 = vmatprep.subr.mxu0 0.0
  %327 = vmatpush1.msra.mxu0 %v236
  %328 = vmatprep.subr.mxu0 0.0
  %329 = vmatpush1.msra.mxu0 %v237
  %330 = vmatprep.subr.mxu0 0.0
  %331 = vmatpush1.msra.mxu0 %v238
  %332 = vmatprep.subr.mxu0 0.0
  %333 = vmatpush1.msra.mxu0 %v239
  %334 = vmatprep.subr.mxu0 0.0
  %335 = vmatpush1.msra.mxu0 %v240
  %336 = vmatprep.subr.mxu0 0.0
  %337 = vmatpush1.msra.mxu0 %v241
  %338 = vmatprep.subr.mxu0 0.0
  %339 = vmatpush1.msra.mxu0 %v242
  %340 = vmatprep.subr.mxu0 0.0
  %341 = vmatpush1.msra.mxu0 %v243
  %342 = vmatprep.subr.mxu0 0.0
  %343 = vmatpush1.msra.mxu0 %v244
  %344 = vmatprep.subr.mxu0 0.0
  %345 = vmatpush1.msra.mxu0 %v245
  %346 = vmatprep.subr.mxu0 0.0
  %347 = vmatpush1.msra.mxu0 %v246
  %348 = vmatprep.subr.mxu0 0.0
  %349 = vmatpush1.msra.mxu0 %v247
  %350 = vmatprep.subr.mxu0 0.0
  %351 = vmatpush1.msra.mxu0 %v248
  %352 = vmatprep.subr.mxu0 0.0
  %353 = vmatpush1.msra.mxu0 %v249
  %354 = vmatprep.subr.mxu0 0.0
  %355 = vmatpush1.msra.mxu0 0.0
  %356 = vmatprep.subr.mxu0 0.0
  %357 = vmatpush1.msra.mxu0 0.0
  %358 = vmatprep.subr.mxu0 0.0
  %359 = vmatpush1.msra.mxu0 0.0
  %360 = vmatprep.subr.mxu0 0.0
  %361 = vmatpush1.msra.mxu0 0.0
  %362 = vmatprep.subr.mxu0 0.0
  %363 = vmatpush1.msra.mxu0 0.0
  %364 = vmatprep.subr.mxu0 0.0
  %365 = vmatpush1.msra.mxu0 0.0
  %366 = vmatprep.subr.mxu0 0.0
  %367 = vmatpush1.msra.mxu0 0.0
  %368 = vmatprep.subr.mxu0 0.0
  %369 = vmatpush1.msra.mxu0 0.0
  %370 = vmatprep.subr.mxu0 0.0
  %371 = vmatpush1.msra.mxu0 0.0
  %372 = vmatprep.subr.mxu0 0.0
  %373 = vmatpush1.msra.mxu0 0.0
  %374 = vmatprep.subr.mxu0 0.0
  %375 = vmatpush1.msra.mxu0 0.0
  %376 = vmatprep.subr.mxu0 0.0
  %377 = vmatpush1.msra.mxu0 0.0
  %378 = vmatprep.subr.mxu0 0.0
  %379 = vmatpush1.msra.mxu0 0.0
  %380 = vmatprep.subr.mxu0 0.0
  %381 = vmatpush1.msra.mxu0 0.0
  %382 = vmatprep.subr.mxu0 0.0
  %383 = vmatpush1.msra.mxu0 0.0
  %384 = vmatprep.subr.mxu0 0.0
  %385 = vmatpush1.msra.mxu0 0.0
  %386 = vmatprep.mubr.f32.mxu0 0.0
  %387 = vmatmul.mubr.f32.gmra.mrb[0].mxu0 %v321
  %v388 = vpop.f32.mrb[0].mxu0
  %v389 = vadd.f32 0.0, %v388
  %v390 = vpop.f32.mrb[0].mxu0
  %391 = vdwg.mxu0
  %v392 = vmul.f32 %v389, 0.03125
  %v393 = vmul.f32 %v320, %v320
  %v394 = vsub.f32 %v392, %v393
  %v395 = vsub.f32 %v233, %v320
  %v396 = vadd.f32 %v394, 1e-05
  %v397 = vrsqrt.pop %v396
  %v398 = vmul.f32 %v395, %v397
  %v399 = vld [vmem:[%s6] sm:$0x1]
  %v401 = vlaneseq
  %v402 = vshrl.u32 %v401, 7
  %v403 = vsub.s32 0, %v402
  %v404 = vrot.slane %v399, %v403
  %v406 = vmul.f32 %v398, %v404
  %v407 = vld [vmem:[%s7] sm:$0x1]
  %v409 = vlaneseq
  %v410 = vshrl.u32 %v409, 7
  %v411 = vsub.s32 0, %v410
  %v412 = vrot.slane %v407, %v411
  %v414 = vadd.f32 %v406, %v412
  %415 = vst [vmem:[%s8] sm:$0xf] %v414
  // Predicated region
  $region34: #{positional_encoding_2d.1} parent=0 // pred_check
    _
  $region35: #{positional_encoding_2d.1} parent=0 // pred_check_branch
    %417 = sbr.rel (0) target = $region37
  $region36: #{positional_encoding_2d.1} parent=0 // pred_region
    _
  $region37: #{positional_encoding_2d.1} parent=0 // pred_fallthru
    _
  // Predicated region
  $region38: #{positional_encoding_2d.1} parent=0 // pred_check
    _
  $region39: #{positional_encoding_2d.1} parent=0 // pred_check_branch
    %419 = sbr.rel (0) target = $region41
  $region40: #{positional_encoding_2d.1} parent=0 // pred_region
    _
  $region41: #{positional_encoding_2d.1} parent=0 // pred_fallthru
    _

</llo_original>
